<compile_context>
chip_gen: v5e
topology: v5e:2x2
jax: 0.10.0
libtpu: 0.0.40
codegen_flags: <defaults>
</compile_context>

<pallas_src>
import jax
import jax.numpy as jnp
import numpy as np
from jax.experimental import pallas as pl
from jax.experimental.pallas import tpu as pltpu

# Problem sizes (small, consistent with the module).
N = 2          # batch
C_IN = 4       # inp_cha
C_OUT = 8      # out_cha  (inp_cha != out_cha  ->  conv_skip is a real conv)
L = 16         # sequence length
K = 15         # conv kernel size
PAD = 7        # conv padding
LP = L + 2 * PAD
EPS = 1e-5


def resnet_block_kernel(xcol_ref, w1_ref, wcomb_ref, vecs_ref, out_ref):
    """Single grid step processes the whole batch.

    xcol_ref : (N*L, K*C_IN)            im2col patches of the zero-padded input
    w1_ref   : (K*C_IN, C_OUT)          conv1 weights, BN1 scale folded in
    wcomb_ref: (K*C_OUT+K*C_IN, C_OUT)  [w2 ; wskip], BN2 scale folded in
    vecs_ref : (4, C_OUT)               rows: folded bias1, PReLU a1, folded bias2, a2
    out_ref  : (N, L*C_OUT)             lane-dense packed output
    """
    xcol = xcol_ref[...]                       # (N*L, K*Cin)
    vecs = vecs_ref[...]                       # (4, C_OUT)
    bias1 = vecs[0:1, :]
    a1 = vecs[1:2, :]
    bias2 = vecs[2:3, :]
    a2 = vecs[3:4, :]

    # ---- conv1 (+ folded BN1) + PReLU1: one im2col matmul for the batch ----
    h1 = jnp.dot(xcol, w1_ref[...], preferred_element_type=jnp.float32)  # (N*L, Cout)
    h1 = h1 + bias1
    h1 = jnp.where(h1 >= 0, h1, a1 * h1)

    # ---- build [im2col(h1_padded) | im2col(x)] in registers ----------------
    # 8-row zero blocks keep every sublane-concat operand 8-aligned; the real
    # padding is 7, so tap k reads rows [k+1, k+1+L) of the 8-padded buffer.
    zpad8 = jnp.zeros((8, C_OUT), jnp.float32)
    comb_rows = []
    for n in range(N):
        h1_n = h1[n * L:(n + 1) * L, :]                              # (L, Cout)
        h1p8 = jnp.concatenate([zpad8, h1_n, zpad8], axis=0)         # (L+16, Cout)
        taps = [h1p8[k + 1:k + 1 + L, :] for k in range(K)]          # K x (L, Cout)
        taps.append(xcol[n * L:(n + 1) * L, :])                      # skip patches
        comb_rows.append(jnp.concatenate(taps, axis=-1))             # (L, K*Cout+K*Cin)
    comb = jnp.concatenate(comb_rows, axis=0)                        # (N*L, 180)

    # ---- conv2 + conv_skip (+ folded BN2) + PReLU2: one matmul -------------
    acc2 = jnp.dot(comb, wcomb_ref[...], preferred_element_type=jnp.float32)
    acc2 = acc2 + bias2
    acc2 = jnp.where(acc2 >= 0, acc2, a2 * acc2)                     # (N*L, Cout)

    # ---- lane-dense packing: (N*L, Cout) -> (N, L*Cout) = (2, 128) ---------
    out = jnp.concatenate(
        [jnp.concatenate([acc2[n * L + l:n * L + l + 1, :] for l in range(L)],
                         axis=-1)
         for n in range(N)], axis=0)                                 # (N, L*Cout)
    out_ref[...] = out.astype(out_ref.dtype)


@jax.jit
def resnet_block_unmasked(x_ncl, params):
    """x_ncl: (N, C_IN, L) float32, PyTorch NCL layout. Returns (N, C_OUT, L)."""
    # --- wrapper glue: im2col, BN/bias folding, weight flattening -----------
    x_nlc = jnp.transpose(x_ncl, (0, 2, 1))                       # (N, L, Cin)
    xpad = jnp.pad(x_nlc, ((0, 0), (PAD, PAD), (0, 0)))           # (N, LP, Cin)
    xcol = jnp.concatenate([xpad[:, k:k + L, :] for k in range(K)],
                           axis=-1)                               # (N, L, K*Cin)
    xcol = xcol.reshape(N * L, K * C_IN)                          # (N*L, K*Cin)

    def fold_bn(gamma, beta, rmean, rvar):
        scale = gamma / jnp.sqrt(rvar + EPS)
        return scale, beta - rmean * scale

    bn1s, bn1b = fold_bn(params['g1'], params['be1'], params['rm1'], params['rv1'])
    bn2s, bn2b = fold_bn(params['g2'], params['be2'], params['rm2'], params['rv2'])

    # (Cout, Cin, K) -> (K*Cin, Cout) so patch layout [tap0 ch..., tap1 ch...]
    def to_col(w):
        return jnp.transpose(w, (2, 1, 0)).reshape(-1, C_OUT)

    w1c = to_col(params['w1']) * bn1s[None, :]                    # (K*Cin, Cout)
    w2c = to_col(params['w2']) * bn2s[None, :]                    # (K*Cout, Cout)
    wsc = to_col(params['wskip']) * bn2s[None, :]                 # (K*Cin, Cout)
    wcomb = jnp.concatenate([w2c, wsc], axis=0)                   # (180, Cout)

    bias1 = params['b1'] * bn1s + bn1b
    bias2 = params['b2'] * bn2s + bn2b
    vecs = jnp.stack([bias1, params['a1'], bias2, params['a2']], axis=0)  # (4, Cout)

    out_flat = pl.pallas_call(
        resnet_block_kernel,
        out_shape=jax.ShapeDtypeStruct((N, L * C_OUT), jnp.float32),
        grid_spec=pltpu.PrefetchScalarGridSpec(
            num_scalar_prefetch=0,
            grid=(1,),
            in_specs=[
                pl.BlockSpec((N * L, K * C_IN), lambda i: (0, 0)),          # xcol
                pl.BlockSpec((K * C_IN, C_OUT), lambda i: (0, 0)),          # w1
                pl.BlockSpec((K * C_OUT + K * C_IN, C_OUT), lambda i: (0, 0)),  # [w2;wskip]
                pl.BlockSpec((4, C_OUT), lambda i: (0, 0)),                 # vecs
            ],
            out_specs=pl.BlockSpec((N, L * C_OUT), lambda i: (0, 0)),
        ),
        compiler_params=pltpu.CompilerParams(
            dimension_semantics=("arbitrary",)),
    )(xcol, w1c, wcomb, vecs)

    out_nlc = out_flat.reshape(N, L, C_OUT)                       # undo lane packing
    return jnp.transpose(out_nlc, (0, 2, 1))                      # (N, Cout, L)


# ----------------------- pure-JAX reference (for checking) -----------------
def _conv1d_ref(x, w, b):
    y = jax.lax.conv_general_dilated(
        x, w, window_strides=(1,), padding=[(PAD, PAD)],
        dimension_numbers=('NCH', 'OIH', 'NCH'))
    if b is not None:
        y = y + b[None, :, None]
    return y


def _ref_forward(x, p):
    def bn(h, g, b, rm, rv):
        return ((h - rm[None, :, None]) / jnp.sqrt(rv[None, :, None] + EPS)
                * g[None, :, None] + b[None, :, None])

    def prelu(h, a):
        return jnp.where(h >= 0, h, a[None, :, None] * h)

    h = _conv1d_ref(x, p['w1'], p['b1'])
    h = prelu(bn(h, p['g1'], p['be1'], p['rm1'], p['rv1']), p['a1'])
    h2 = _conv1d_ref(h, p['w2'], p['b2'])
    skip = _conv1d_ref(x, p['wskip'], None)
    return prelu(bn(h2 + skip, p['g2'], p['be2'], p['rm2'], p['rv2']), p['a2'])


def make_params(key):
    ks = jax.random.split(key, 16)
    f32 = jnp.float32
    return {
        'w1': 0.1 * jax.random.normal(ks[0], (C_OUT, C_IN, K), f32),
        'b1': 0.1 * jax.random.normal(ks[1], (C_OUT,), f32),
        'w2': 0.1 * jax.random.normal(ks[2], (C_OUT, C_OUT, K), f32),
        'b2': 0.1 * jax.random.normal(ks[3], (C_OUT,), f32),
        'wskip': 0.1 * jax.random.normal(ks[4], (C_OUT, C_IN, K), f32),
        # BatchNorm1d (inference/eval mode: running stats)
        'g1': 1.0 + 0.1 * jax.random.normal(ks[5], (C_OUT,), f32),
        'be1': 0.1 * jax.random.normal(ks[6], (C_OUT,), f32),
        'rm1': 0.1 * jax.random.normal(ks[7], (C_OUT,), f32),
        'rv1': jax.random.uniform(ks[8], (C_OUT,), f32, 0.5, 1.5),
        'g2': 1.0 + 0.1 * jax.random.normal(ks[9], (C_OUT,), f32),
        'be2': 0.1 * jax.random.normal(ks[10], (C_OUT,), f32),
        'rm2': 0.1 * jax.random.normal(ks[11], (C_OUT,), f32),
        'rv2': jax.random.uniform(ks[12], (C_OUT,), f32, 0.5, 1.5),
        # PReLU(out_cha, init=0.2)
        'a1': jnp.full((C_OUT,), 0.2, f32),
        'a2': jnp.full((C_OUT,), 0.2, f32),
    }


if __name__ == "__main__":
    key = jax.random.PRNGKey(0)
    k_x, k_p = jax.random.split(key)
    params = make_params(k_p)
    x = jax.random.normal(k_x, (N, C_IN, L), jnp.float32)   # PyTorch NCL input

    out = resnet_block_unmasked(x, params)
    out = jax.block_until_ready(out)

    ref = jax.block_until_ready(_ref_forward(x, params))
    np.testing.assert_allclose(np.asarray(out), np.asarray(ref),
                               atol=1e-4, rtol=1e-4)
    assert out.shape == (N, C_OUT, L)
    print("KERNEL_OK")
</pallas_src>

<mosaic_0001>
module attributes {stable_mosaic.version = 11 : i64} {
  func.func @resnet_block_kernel(%arg0: i32, %arg1: memref<32x60xf32, #tpu.memory_space<vmem>>, %arg2: memref<60x8xf32, #tpu.memory_space<vmem>>, %arg3: memref<180x8xf32, #tpu.memory_space<vmem>>, %arg4: memref<4x8xf32, #tpu.memory_space<vmem>>, %arg5: memref<2x128xf32, #tpu.memory_space<vmem>>) attributes {dimension_semantics = [#tpu.dimension_semantics<arbitrary>], iteration_bounds = array<i64: 1>, scalar_prefetch = 0 : i64, scratch_operands = 0 : i64, tpu.core_type = #tpu.core_type<tc>, window_params = [{pipeline_mode = #tpu.pipeline_mode<synchronous>, transform_indices = @transform_0, window_bounds = array<i64: 32, 60>}, {pipeline_mode = #tpu.pipeline_mode<synchronous>, transform_indices = @transform_1, window_bounds = array<i64: 60, 8>}, {pipeline_mode = #tpu.pipeline_mode<synchronous>, transform_indices = @transform_2, window_bounds = array<i64: 180, 8>}, {pipeline_mode = #tpu.pipeline_mode<synchronous>, transform_indices = @transform_3, window_bounds = array<i64: 4, 8>}, {pipeline_mode = #tpu.pipeline_mode<synchronous>, transform_indices = @transform_4, window_bounds = array<i64: 2, 128>}]} {
    %c0 = arith.constant 0 : index
    %c0_0 = arith.constant 0 : index
    %0 = vector.load %arg1[%c0, %c0_0] : memref<32x60xf32, #tpu.memory_space<vmem>>, vector<32x60xf32>
    %c0_1 = arith.constant 0 : index
    %c0_2 = arith.constant 0 : index
    %1 = vector.load %arg4[%c0_1, %c0_2] : memref<4x8xf32, #tpu.memory_space<vmem>>, vector<4x8xf32>
    %2 = vector.extract_strided_slice %1 {offsets = [0, 0], sizes = [1, 8], strides = [1, 1]} : vector<4x8xf32> to vector<1x8xf32>
    %3 = vector.extract_strided_slice %1 {offsets = [1, 0], sizes = [1, 8], strides = [1, 1]} : vector<4x8xf32> to vector<1x8xf32>
    %4 = vector.extract_strided_slice %1 {offsets = [2, 0], sizes = [1, 8], strides = [1, 1]} : vector<4x8xf32> to vector<1x8xf32>
    %5 = vector.extract_strided_slice %1 {offsets = [3, 0], sizes = [1, 8], strides = [1, 1]} : vector<4x8xf32> to vector<1x8xf32>
    %c0_3 = arith.constant 0 : index
    %c0_4 = arith.constant 0 : index
    %6 = vector.load %arg2[%c0_3, %c0_4] : memref<60x8xf32, #tpu.memory_space<vmem>>, vector<60x8xf32>
    %cst = arith.constant dense<0.000000e+00> : vector<32x8xf32>
    %7 = tpu.matmul %0, %6, %cst {dimension_numbers = #tpu.dot_dimension_numbers<[1], [0], [0], [1], [0, 0, 1, 1], [], []>} : vector<32x60xf32>, vector<60x8xf32>, vector<32x8xf32> -> vector<32x8xf32>
    %8 = vector.broadcast %2 : vector<1x8xf32> to vector<32x8xf32>
    %9 = arith.addf %7, %8 : vector<32x8xf32>
    %cst_5 = arith.constant 0.000000e+00 : f32
    %10 = vector.broadcast %cst_5 : f32 to vector<32x8xf32>
    %11 = arith.cmpf oge, %9, %10 : vector<32x8xf32>
    %12 = vector.broadcast %3 : vector<1x8xf32> to vector<32x8xf32>
    %13 = arith.mulf %12, %9 : vector<32x8xf32>
    %14 = arith.select %11, %9, %13 : vector<32x8xi1>, vector<32x8xf32>
    %cst_6 = arith.constant 0.000000e+00 : f32
    %15 = vector.broadcast %cst_6 : f32 to vector<8x8xf32>
    %16 = vector.extract_strided_slice %14 {offsets = [0, 0], sizes = [16, 8], strides = [1, 1]} : vector<32x8xf32> to vector<16x8xf32>
    %17 = tpu.concatenate %15, %16, %15 in 0 : vector<8x8xf32>, vector<16x8xf32>, vector<8x8xf32> -> vector<32x8xf32>
    %18 = vector.extract_strided_slice %17 {offsets = [1, 0], sizes = [16, 8], strides = [1, 1]} : vector<32x8xf32> to vector<16x8xf32>
    %19 = vector.extract_strided_slice %17 {offsets = [2, 0], sizes = [16, 8], strides = [1, 1]} : vector<32x8xf32> to vector<16x8xf32>
    %20 = vector.extract_strided_slice %17 {offsets = [3, 0], sizes = [16, 8], strides = [1, 1]} : vector<32x8xf32> to vector<16x8xf32>
    %21 = vector.extract_strided_slice %17 {offsets = [4, 0], sizes = [16, 8], strides = [1, 1]} : vector<32x8xf32> to vector<16x8xf32>
    %22 = vector.extract_strided_slice %17 {offsets = [5, 0], sizes = [16, 8], strides = [1, 1]} : vector<32x8xf32> to vector<16x8xf32>
    %23 = vector.extract_strided_slice %17 {offsets = [6, 0], sizes = [16, 8], strides = [1, 1]} : vector<32x8xf32> to vector<16x8xf32>
    %24 = vector.extract_strided_slice %17 {offsets = [7, 0], sizes = [16, 8], strides = [1, 1]} : vector<32x8xf32> to vector<16x8xf32>
    %25 = vector.extract_strided_slice %17 {offsets = [8, 0], sizes = [16, 8], strides = [1, 1]} : vector<32x8xf32> to vector<16x8xf32>
    %26 = vector.extract_strided_slice %17 {offsets = [9, 0], sizes = [16, 8], strides = [1, 1]} : vector<32x8xf32> to vector<16x8xf32>
    %27 = vector.extract_strided_slice %17 {offsets = [10, 0], sizes = [16, 8], strides = [1, 1]} : vector<32x8xf32> to vector<16x8xf32>
    %28 = vector.extract_strided_slice %17 {offsets = [11, 0], sizes = [16, 8], strides = [1, 1]} : vector<32x8xf32> to vector<16x8xf32>
    %29 = vector.extract_strided_slice %17 {offsets = [12, 0], sizes = [16, 8], strides = [1, 1]} : vector<32x8xf32> to vector<16x8xf32>
    %30 = vector.extract_strided_slice %17 {offsets = [13, 0], sizes = [16, 8], strides = [1, 1]} : vector<32x8xf32> to vector<16x8xf32>
    %31 = vector.extract_strided_slice %17 {offsets = [14, 0], sizes = [16, 8], strides = [1, 1]} : vector<32x8xf32> to vector<16x8xf32>
    %32 = vector.extract_strided_slice %17 {offsets = [15, 0], sizes = [16, 8], strides = [1, 1]} : vector<32x8xf32> to vector<16x8xf32>
    %33 = vector.extract_strided_slice %0 {offsets = [0, 0], sizes = [16, 60], strides = [1, 1]} : vector<32x60xf32> to vector<16x60xf32>
    %34 = tpu.concatenate %18, %19, %20, %21, %22, %23, %24, %25, %26, %27, %28, %29, %30, %31, %32, %33 in 1 : vector<16x8xf32>, vector<16x8xf32>, vector<16x8xf32>, vector<16x8xf32>, vector<16x8xf32>, vector<16x8xf32>, vector<16x8xf32>, vector<16x8xf32>, vector<16x8xf32>, vector<16x8xf32>, vector<16x8xf32>, vector<16x8xf32>, vector<16x8xf32>, vector<16x8xf32>, vector<16x8xf32>, vector<16x60xf32> -> vector<16x180xf32>
    %35 = vector.extract_strided_slice %14 {offsets = [16, 0], sizes = [16, 8], strides = [1, 1]} : vector<32x8xf32> to vector<16x8xf32>
    %36 = tpu.concatenate %15, %35, %15 in 0 : vector<8x8xf32>, vector<16x8xf32>, vector<8x8xf32> -> vector<32x8xf32>
    %37 = vector.extract_strided_slice %36 {offsets = [1, 0], sizes = [16, 8], strides = [1, 1]} : vector<32x8xf32> to vector<16x8xf32>
    %38 = vector.extract_strided_slice %36 {offsets = [2, 0], sizes = [16, 8], strides = [1, 1]} : vector<32x8xf32> to vector<16x8xf32>
    %39 = vector.extract_strided_slice %36 {offsets = [3, 0], sizes = [16, 8], strides = [1, 1]} : vector<32x8xf32> to vector<16x8xf32>
    %40 = vector.extract_strided_slice %36 {offsets = [4, 0], sizes = [16, 8], strides = [1, 1]} : vector<32x8xf32> to vector<16x8xf32>
    %41 = vector.extract_strided_slice %36 {offsets = [5, 0], sizes = [16, 8], strides = [1, 1]} : vector<32x8xf32> to vector<16x8xf32>
    %42 = vector.extract_strided_slice %36 {offsets = [6, 0], sizes = [16, 8], strides = [1, 1]} : vector<32x8xf32> to vector<16x8xf32>
    %43 = vector.extract_strided_slice %36 {offsets = [7, 0], sizes = [16, 8], strides = [1, 1]} : vector<32x8xf32> to vector<16x8xf32>
    %44 = vector.extract_strided_slice %36 {offsets = [8, 0], sizes = [16, 8], strides = [1, 1]} : vector<32x8xf32> to vector<16x8xf32>
    %45 = vector.extract_strided_slice %36 {offsets = [9, 0], sizes = [16, 8], strides = [1, 1]} : vector<32x8xf32> to vector<16x8xf32>
    %46 = vector.extract_strided_slice %36 {offsets = [10, 0], sizes = [16, 8], strides = [1, 1]} : vector<32x8xf32> to vector<16x8xf32>
    %47 = vector.extract_strided_slice %36 {offsets = [11, 0], sizes = [16, 8], strides = [1, 1]} : vector<32x8xf32> to vector<16x8xf32>
    %48 = vector.extract_strided_slice %36 {offsets = [12, 0], sizes = [16, 8], strides = [1, 1]} : vector<32x8xf32> to vector<16x8xf32>
    %49 = vector.extract_strided_slice %36 {offsets = [13, 0], sizes = [16, 8], strides = [1, 1]} : vector<32x8xf32> to vector<16x8xf32>
    %50 = vector.extract_strided_slice %36 {offsets = [14, 0], sizes = [16, 8], strides = [1, 1]} : vector<32x8xf32> to vector<16x8xf32>
    %51 = vector.extract_strided_slice %36 {offsets = [15, 0], sizes = [16, 8], strides = [1, 1]} : vector<32x8xf32> to vector<16x8xf32>
    %52 = vector.extract_strided_slice %0 {offsets = [16, 0], sizes = [16, 60], strides = [1, 1]} : vector<32x60xf32> to vector<16x60xf32>
    %53 = tpu.concatenate %37, %38, %39, %40, %41, %42, %43, %44, %45, %46, %47, %48, %49, %50, %51, %52 in 1 : vector<16x8xf32>, vector<16x8xf32>, vector<16x8xf32>, vector<16x8xf32>, vector<16x8xf32>, vector<16x8xf32>, vector<16x8xf32>, vector<16x8xf32>, vector<16x8xf32>, vector<16x8xf32>, vector<16x8xf32>, vector<16x8xf32>, vector<16x8xf32>, vector<16x8xf32>, vector<16x8xf32>, vector<16x60xf32> -> vector<16x180xf32>
    %54 = tpu.concatenate %34, %53 in 0 : vector<16x180xf32>, vector<16x180xf32> -> vector<32x180xf32>
    %c0_7 = arith.constant 0 : index
    %c0_8 = arith.constant 0 : index
    %55 = vector.load %arg3[%c0_7, %c0_8] : memref<180x8xf32, #tpu.memory_space<vmem>>, vector<180x8xf32>
    %cst_9 = arith.constant dense<0.000000e+00> : vector<32x8xf32>
    %56 = tpu.matmul %54, %55, %cst_9 {dimension_numbers = #tpu.dot_dimension_numbers<[1], [0], [0], [1], [0, 0, 1, 1], [], []>} : vector<32x180xf32>, vector<180x8xf32>, vector<32x8xf32> -> vector<32x8xf32>
    %57 = vector.broadcast %4 : vector<1x8xf32> to vector<32x8xf32>
    %58 = arith.addf %56, %57 : vector<32x8xf32>
    %cst_10 = arith.constant 0.000000e+00 : f32
    %59 = vector.broadcast %cst_10 : f32 to vector<32x8xf32>
    %60 = arith.cmpf oge, %58, %59 : vector<32x8xf32>
    %61 = vector.broadcast %5 : vector<1x8xf32> to vector<32x8xf32>
    %62 = arith.mulf %61, %58 : vector<32x8xf32>
    %63 = arith.select %60, %58, %62 : vector<32x8xi1>, vector<32x8xf32>
    %64 = vector.extract_strided_slice %63 {offsets = [0, 0], sizes = [1, 8], strides = [1, 1]} : vector<32x8xf32> to vector<1x8xf32>
    %65 = vector.extract_strided_slice %63 {offsets = [1, 0], sizes = [1, 8], strides = [1, 1]} : vector<32x8xf32> to vector<1x8xf32>
    %66 = vector.extract_strided_slice %63 {offsets = [2, 0], sizes = [1, 8], strides = [1, 1]} : vector<32x8xf32> to vector<1x8xf32>
    %67 = vector.extract_strided_slice %63 {offsets = [3, 0], sizes = [1, 8], strides = [1, 1]} : vector<32x8xf32> to vector<1x8xf32>
    %68 = vector.extract_strided_slice %63 {offsets = [4, 0], sizes = [1, 8], strides = [1, 1]} : vector<32x8xf32> to vector<1x8xf32>
    %69 = vector.extract_strided_slice %63 {offsets = [5, 0], sizes = [1, 8], strides = [1, 1]} : vector<32x8xf32> to vector<1x8xf32>
    %70 = vector.extract_strided_slice %63 {offsets = [6, 0], sizes = [1, 8], strides = [1, 1]} : vector<32x8xf32> to vector<1x8xf32>
    %71 = vector.extract_strided_slice %63 {offsets = [7, 0], sizes = [1, 8], strides = [1, 1]} : vector<32x8xf32> to vector<1x8xf32>
    %72 = vector.extract_strided_slice %63 {offsets = [8, 0], sizes = [1, 8], strides = [1, 1]} : vector<32x8xf32> to vector<1x8xf32>
    %73 = vector.extract_strided_slice %63 {offsets = [9, 0], sizes = [1, 8], strides = [1, 1]} : vector<32x8xf32> to vector<1x8xf32>
    %74 = vector.extract_strided_slice %63 {offsets = [10, 0], sizes = [1, 8], strides = [1, 1]} : vector<32x8xf32> to vector<1x8xf32>
    %75 = vector.extract_strided_slice %63 {offsets = [11, 0], sizes = [1, 8], strides = [1, 1]} : vector<32x8xf32> to vector<1x8xf32>
    %76 = vector.extract_strided_slice %63 {offsets = [12, 0], sizes = [1, 8], strides = [1, 1]} : vector<32x8xf32> to vector<1x8xf32>
    %77 = vector.extract_strided_slice %63 {offsets = [13, 0], sizes = [1, 8], strides = [1, 1]} : vector<32x8xf32> to vector<1x8xf32>
    %78 = vector.extract_strided_slice %63 {offsets = [14, 0], sizes = [1, 8], strides = [1, 1]} : vector<32x8xf32> to vector<1x8xf32>
    %79 = vector.extract_strided_slice %63 {offsets = [15, 0], sizes = [1, 8], strides = [1, 1]} : vector<32x8xf32> to vector<1x8xf32>
    %80 = tpu.concatenate %64, %65, %66, %67, %68, %69, %70, %71, %72, %73, %74, %75, %76, %77, %78, %79 in 1 : vector<1x8xf32>, vector<1x8xf32>, vector<1x8xf32>, vector<1x8xf32>, vector<1x8xf32>, vector<1x8xf32>, vector<1x8xf32>, vector<1x8xf32>, vector<1x8xf32>, vector<1x8xf32>, vector<1x8xf32>, vector<1x8xf32>, vector<1x8xf32>, vector<1x8xf32>, vector<1x8xf32>, vector<1x8xf32> -> vector<1x128xf32>
    %81 = vector.extract_strided_slice %63 {offsets = [16, 0], sizes = [1, 8], strides = [1, 1]} : vector<32x8xf32> to vector<1x8xf32>
    %82 = vector.extract_strided_slice %63 {offsets = [17, 0], sizes = [1, 8], strides = [1, 1]} : vector<32x8xf32> to vector<1x8xf32>
    %83 = vector.extract_strided_slice %63 {offsets = [18, 0], sizes = [1, 8], strides = [1, 1]} : vector<32x8xf32> to vector<1x8xf32>
    %84 = vector.extract_strided_slice %63 {offsets = [19, 0], sizes = [1, 8], strides = [1, 1]} : vector<32x8xf32> to vector<1x8xf32>
    %85 = vector.extract_strided_slice %63 {offsets = [20, 0], sizes = [1, 8], strides = [1, 1]} : vector<32x8xf32> to vector<1x8xf32>
    %86 = vector.extract_strided_slice %63 {offsets = [21, 0], sizes = [1, 8], strides = [1, 1]} : vector<32x8xf32> to vector<1x8xf32>
    %87 = vector.extract_strided_slice %63 {offsets = [22, 0], sizes = [1, 8], strides = [1, 1]} : vector<32x8xf32> to vector<1x8xf32>
    %88 = vector.extract_strided_slice %63 {offsets = [23, 0], sizes = [1, 8], strides = [1, 1]} : vector<32x8xf32> to vector<1x8xf32>
    %89 = vector.extract_strided_slice %63 {offsets = [24, 0], sizes = [1, 8], strides = [1, 1]} : vector<32x8xf32> to vector<1x8xf32>
    %90 = vector.extract_strided_slice %63 {offsets = [25, 0], sizes = [1, 8], strides = [1, 1]} : vector<32x8xf32> to vector<1x8xf32>
    %91 = vector.extract_strided_slice %63 {offsets = [26, 0], sizes = [1, 8], strides = [1, 1]} : vector<32x8xf32> to vector<1x8xf32>
    %92 = vector.extract_strided_slice %63 {offsets = [27, 0], sizes = [1, 8], strides = [1, 1]} : vector<32x8xf32> to vector<1x8xf32>
    %93 = vector.extract_strided_slice %63 {offsets = [28, 0], sizes = [1, 8], strides = [1, 1]} : vector<32x8xf32> to vector<1x8xf32>
    %94 = vector.extract_strided_slice %63 {offsets = [29, 0], sizes = [1, 8], strides = [1, 1]} : vector<32x8xf32> to vector<1x8xf32>
    %95 = vector.extract_strided_slice %63 {offsets = [30, 0], sizes = [1, 8], strides = [1, 1]} : vector<32x8xf32> to vector<1x8xf32>
    %96 = vector.extract_strided_slice %63 {offsets = [31, 0], sizes = [1, 8], strides = [1, 1]} : vector<32x8xf32> to vector<1x8xf32>
    %97 = tpu.concatenate %81, %82, %83, %84, %85, %86, %87, %88, %89, %90, %91, %92, %93, %94, %95, %96 in 1 : vector<1x8xf32>, vector<1x8xf32>, vector<1x8xf32>, vector<1x8xf32>, vector<1x8xf32>, vector<1x8xf32>, vector<1x8xf32>, vector<1x8xf32>, vector<1x8xf32>, vector<1x8xf32>, vector<1x8xf32>, vector<1x8xf32>, vector<1x8xf32>, vector<1x8xf32>, vector<1x8xf32>, vector<1x8xf32> -> vector<1x128xf32>
    %98 = tpu.concatenate %80, %97 in 0 : vector<1x128xf32>, vector<1x128xf32> -> vector<2x128xf32>
    %c0_11 = arith.constant 0 : index
    %c0_12 = arith.constant 0 : index
    %99 = vector.load %arg5[%c0_11, %c0_12] : memref<2x128xf32, #tpu.memory_space<vmem>>, vector<2x128xf32>
    tpu.vector_store %arg5[%c0_11, %c0_12], %98 {strides = array<i32>} : memref<2x128xf32, #tpu.memory_space<vmem>>, vector<2x128xf32>,
    return
  }
  func.func @transform_0(%arg0: i32) -> (i32, i32) {
    %c0_i32 = arith.constant 0 : i32
    %c0_i32_0 = arith.constant 0 : i32
    %c0_i32_1 = arith.constant 0 : i32
    return %c0_i32, %c0_i32_0 : i32, i32
  }
  func.func @transform_1(%arg0: i32) -> (i32, i32) {
    %c0_i32 = arith.constant 0 : i32
    %c0_i32_0 = arith.constant 0 : i32
    %c0_i32_1 = arith.constant 0 : i32
    return %c0_i32, %c0_i32_0 : i32, i32
  }
  func.func @transform_2(%arg0: i32) -> (i32, i32) {
    %c0_i32 = arith.constant 0 : i32
    %c0_i32_0 = arith.constant 0 : i32
    %c0_i32_1 = arith.constant 0 : i32
    return %c0_i32, %c0_i32_0 : i32, i32
  }
  func.func @transform_3(%arg0: i32) -> (i32, i32) {
    %c0_i32 = arith.constant 0 : i32
    %c0_i32_0 = arith.constant 0 : i32
    %c0_i32_1 = arith.constant 0 : i32
    return %c0_i32, %c0_i32_0 : i32, i32
  }
  func.func @transform_4(%arg0: i32) -> (i32, i32) {
    %c0_i32 = arith.constant 0 : i32
    %c0_i32_0 = arith.constant 0 : i32
    %c0_i32_1 = arith.constant 0 : i32
    return %c0_i32, %c0_i32_0 : i32, i32
  }
}

</mosaic_0001>

<llo_original>
// kernel: resnet_block_unmasked.1
$region0: #{resnet_block_unmasked.1}
  #allocation0 [shape = 'u32[]', space=smem, size = 0x4, offset = 0x4, fixed_abs, tag = 'smem constant byte address 0x4 - core index']
  #allocation1 [shape = 'u32[72,128]{1,0:T(1,128)}', space=vmem, size = 0x9000, scoped, tag = 'internal scratch']
  %s0 = inlined_call_operand.vmem [shape: f32[32,60], index: 0, kind: input, shape index: {}]
  %s1 = inlined_call_operand.vmem [shape: f32[60,8], index: 1, kind: input, shape index: {}]
  %s2 = inlined_call_operand.vmem [shape: f32[180,8], index: 2, kind: input, shape index: {}]
  %s3 = inlined_call_operand.vmem [shape: f32[4,8], index: 3, kind: input, shape index: {}]
  %s4 = inlined_call_operand.vmem [shape: f32[2,128], index: 4, kind: output, shape index: {}]
  %s5 = sld [smem:[#allocation0]]
  $region26: #{resnet_block_unmasked.1} parent=0
    _
  %s7 = ssub.s32 1, %s5
  %s8 = scalar_select 0, %s7, %s5
  // Predicated region
  $region2: #{resnet_block_unmasked.1} parent=0 // pred_check
    _
  $region3: #{resnet_block_unmasked.1} parent=0 // pred_check_branch
    %10 = sbr.rel (0) target = $region5
  $region4: #{resnet_block_unmasked.1} parent=0 // pred_region
    _
  $region5: #{resnet_block_unmasked.1} parent=0 // pred_fallthru
    _
  // Predicated region
  $region6: #{resnet_block_unmasked.1} parent=0 // pred_check
    _
  $region7: #{resnet_block_unmasked.1} parent=0 // pred_check_branch
    %12 = sbr.rel (0) target = $region9
  $region8: #{resnet_block_unmasked.1} parent=0 // pred_region
    _
  $region9: #{resnet_block_unmasked.1} parent=0 // pred_fallthru
    _
  // Predicated region
  $region10: #{resnet_block_unmasked.1} parent=0 // pred_check
    _
  $region11: #{resnet_block_unmasked.1} parent=0 // pred_check_branch
    %14 = sbr.rel (0) target = $region13
  $region12: #{resnet_block_unmasked.1} parent=0 // pred_region
    _
  $region13: #{resnet_block_unmasked.1} parent=0 // pred_fallthru
    _
  // Predicated region
  $region14: #{resnet_block_unmasked.1} parent=0 // pred_check
    _
  $region15: #{resnet_block_unmasked.1} parent=0 // pred_check_branch
    %16 = sbr.rel (0) target = $region17
  $region16: #{resnet_block_unmasked.1} parent=0 // pred_region
    _
  $region17: #{resnet_block_unmasked.1} parent=0 // pred_fallthru
    _
  %v17 = vld [vmem:[%s0] sm:$0xff]
  %v18 = vld [vmem:[%s0 + $0x8] sm:$0xff]
  %v19 = vld [vmem:[%s0 + $0x10] sm:$0xff]
  %v20 = vld [vmem:[%s0 + $0x18] sm:$0xff]
  %v21 = vld [vmem:[%s3] sm:$0xf]
  %v22 = vld [vmem:[%s1] sm:$0xff]
  %v23 = vld [vmem:[%s1 + $0x8] sm:$0xff]
  %v24 = vld [vmem:[%s1 + $0x10] sm:$0xff]
  %v25 = vld [vmem:[%s1 + $0x18] sm:$0xff]
  %v26 = vld [vmem:[%s1 + $0x20] sm:$0xff]
  %v27 = vld [vmem:[%s1 + $0x28] sm:$0xff]
  %v28 = vld [vmem:[%s1 + $0x30] sm:$0xff]
  %v29 = vld [vmem:[%s1 + $0x38] sm:$0xf]
  %v30 = vperm.slane %v21, 0
  %vm31 = vcmask 490496
  %v33 = vsel %vm31, %v17, 0
  %v36 = vsel %vm31, %v18, 0
  %v39 = vsel %vm31, %v19, 0
  %v42 = vsel %vm31, %v20, 0
  %vm44 = vcmask 1043456
  %v46 = vsel %vm44, %v29, 0
  %48 = vmatpush.msra.mxu0 0.0
  %49 = vmatpush.msra.mxu0 0.0
  %50 = vmatpush.msra.mxu0 0.0
  %51 = vmatpush.msra.mxu0 0.0
  %52 = vmatpush.msra.mxu0 0.0
  %53 = vmatpush.msra.mxu0 0.0
  %54 = vmatpush.msra.mxu0 0.0
  %55 = vmatpush.msra.mxu0 0.0
  %56 = vmatpush.msra.mxu0 %v46
  %57 = vmatpush.msra.mxu0 %v28
  %58 = vmatpush.msra.mxu0 %v27
  %59 = vmatpush.msra.mxu0 %v26
  %60 = vmatpush.msra.mxu0 %v25
  %61 = vmatpush.msra.mxu0 %v24
  %62 = vmatpush.msra.mxu0 %v23
  %63 = vmatpush.msra.mxu0 %v22
  %64 = vmatmul.f32.gmra.mxu0 %v33
  %v65 = vpop.f32.mrf.mxu0
  %v66 = vadd.f32 %v30, %v65
  %67 = vmatmul.f32.gmra.mxu0 %v36
  %v68 = vpop.f32.mrf.mxu0
  %v69 = vadd.f32 %v30, %v68
  %70 = vmatmul.f32.gmra.mxu0 %v39
  %v71 = vpop.f32.mrf.mxu0
  %v72 = vadd.f32 %v30, %v71
  %73 = vmatmul.f32.gmra.mxu0 %v42
  %v74 = vpop.f32.mrf.mxu0
  %v75 = vadd.f32 %v30, %v74
  %76 = vdwg.mxu0
  %vm77 = vcmp.ge.f32.partialorder %v66, 0.0
  %vm78 = vcmp.ge.f32.partialorder %v69, 0.0
  %vm79 = vcmp.ge.f32.partialorder %v72, 0.0
  %vm80 = vcmp.ge.f32.partialorder %v75, 0.0
  %v81 = vperm.slane %v21, 1
  %v82 = vmul.f32 %v81, %v66
  %v83 = vmul.f32 %v81, %v69
  %v84 = vmul.f32 %v81, %v72
  %v85 = vmul.f32 %v81, %v75
  %v86 = vsel %vm77, %v66, %v82
  %v87 = vsel %vm78, %v69, %v83
  %v88 = vsel %vm79, %v72, %v84
  %v89 = vsel %vm80, %v75, %v85
  %vm93 = vcmask 1046528
  %v94 = vrot.slane 0.0, 1
  %v95 = vrot.slane %v86, 1
  %v96 = vsel %vm93, %v94, %v95
  %v97 = vrot.slane %v87, 1
  %v98 = vsel %vm93, %v95, %v97
  %99 = vrot.lane.b32.xlu0 %v96, 8
  %v100 = vpop.permute.xlu0 %99
  %101 = vrot.lane.b32.xlu0 %v98, 8
  %v102 = vpop.permute.xlu0 %101
  %103 = vrot.lane.b32.xlu0 %v97, 8
  %v104 = vpop.permute.xlu0 %103
  %vm108 = vcmask 1045504
  %v109 = vrot.slane 0.0, 2
  %v110 = vrot.slane %v86, 2
  %v111 = vsel %vm108, %v109, %v110
  %v112 = vrot.slane %v87, 2
  %v113 = vsel %vm108, %v110, %v112
  %114 = vrot.lane.b32.xlu0 %v111, 16
  %v115 = vpop.permute.xlu0 %114
  %116 = vrot.lane.b32.xlu0 %v113, 16
  %v117 = vpop.permute.xlu0 %116
  %118 = vrot.lane.b32.xlu0 %v112, 16
  %v119 = vpop.permute.xlu0 %118
  %vm123 = vcmask 1044480
  %v124 = vrot.slane 0.0, 3
  %v125 = vrot.slane %v86, 3
  %v126 = vsel %vm123, %v124, %v125
  %v127 = vrot.slane %v87, 3
  %v128 = vsel %vm123, %v125, %v127
  %129 = vrot.lane.b32.xlu0 %v126, 24
  %v130 = vpop.permute.xlu0 %129
  %131 = vrot.lane.b32.xlu0 %v128, 24
  %v132 = vpop.permute.xlu0 %131
  %133 = vrot.lane.b32.xlu0 %v127, 24
  %v134 = vpop.permute.xlu0 %133
  %v138 = vrot.slane 0.0, 4
  %v139 = vrot.slane %v86, 4
  %v140 = vsel %vm44, %v138, %v139
  %v141 = vrot.slane %v87, 4
  %v142 = vsel %vm44, %v139, %v141
  %143 = vrot.lane.b32.xlu0 %v140, 32
  %v144 = vpop.permute.xlu0 %143
  %145 = vrot.lane.b32.xlu0 %v142, 32
  %v146 = vpop.permute.xlu0 %145
  %147 = vrot.lane.b32.xlu0 %v141, 32
  %v148 = vpop.permute.xlu0 %147
  %vm152 = vcmask 1042432
  %v153 = vrot.slane 0.0, 5
  %v154 = vrot.slane %v86, 5
  %v155 = vsel %vm152, %v153, %v154
  %v156 = vrot.slane %v87, 5
  %v157 = vsel %vm152, %v154, %v156
  %158 = vrot.lane.b32.xlu0 %v155, 40
  %v159 = vpop.permute.xlu0 %158
  %160 = vrot.lane.b32.xlu0 %v157, 40
  %v161 = vpop.permute.xlu0 %160
  %162 = vrot.lane.b32.xlu0 %v156, 40
  %v163 = vpop.permute.xlu0 %162
  %vm167 = vcmask 1041408
  %v168 = vrot.slane 0.0, 6
  %v169 = vrot.slane %v86, 6
  %v170 = vsel %vm167, %v168, %v169
  %v171 = vrot.slane %v87, 6
  %v172 = vsel %vm167, %v169, %v171
  %173 = vrot.lane.b32.xlu0 %v170, 48
  %v174 = vpop.permute.xlu0 %173
  %175 = vrot.lane.b32.xlu0 %v172, 48
  %v176 = vpop.permute.xlu0 %175
  %177 = vrot.lane.b32.xlu0 %v171, 48
  %v178 = vpop.permute.xlu0 %177
  %vm182 = vcmask 1040384
  %v183 = vrot.slane %v86, 7
  %v184 = vrot.slane %v87, 7
  %v185 = vsel %vm182, %v183, %v184
  %186 = vrot.lane.b32.xlu0 %v183, 56
  %v187 = vpop.permute.xlu0 %186
  %188 = vrot.lane.b32.xlu0 %v185, 56
  %v189 = vpop.permute.xlu0 %188
  %190 = vrot.lane.b32.xlu0 %v184, 56
  %v191 = vpop.permute.xlu0 %190
  %195 = vrot.lane.b32.xlu0 %v86, 64
  %v196 = vpop.permute.xlu0 %195
  %197 = vrot.lane.b32.xlu0 %v87, 64
  %v198 = vpop.permute.xlu0 %197
  %199 = vrot.lane.b32.xlu0 0.0, 64
  %v200 = vpop.permute.xlu0 %199
  %v204 = vsel %vm93, %v97, %v94
  %205 = vrot.lane.b32.xlu0 %v98, 72
  %v206 = vpop.permute.xlu0 %205
  %207 = vrot.lane.b32.xlu0 %v204, 72
  %v208 = vpop.permute.xlu0 %207
  %209 = vrot.lane.b32.xlu0 %v94, 72
  %v210 = vpop.permute.xlu0 %209
  %v214 = vsel %vm108, %v112, %v109
  %215 = vrot.lane.b32.xlu0 %v113, 80
  %v216 = vpop.permute.xlu0 %215
  %217 = vrot.lane.b32.xlu0 %v214, 80
  %v218 = vpop.permute.xlu0 %217
  %219 = vrot.lane.b32.xlu0 %v109, 80
  %v220 = vpop.permute.xlu0 %219
  %v224 = vsel %vm123, %v127, %v124
  %225 = vrot.lane.b32.xlu0 %v128, 88
  %v226 = vpop.permute.xlu0 %225
  %227 = vrot.lane.b32.xlu0 %v224, 88
  %v228 = vpop.permute.xlu0 %227
  %229 = vrot.lane.b32.xlu0 %v124, 88
  %v230 = vpop.permute.xlu0 %229
  %v234 = vsel %vm44, %v141, %v138
  %235 = vrot.lane.b32.xlu0 %v142, 96
  %v236 = vpop.permute.xlu0 %235
  %237 = vrot.lane.b32.xlu0 %v234, 96
  %v238 = vpop.permute.xlu0 %237
  %239 = vrot.lane.b32.xlu0 %v138, 96
  %v240 = vpop.permute.xlu0 %239
  %v244 = vsel %vm152, %v156, %v153
  %245 = vrot.lane.b32.xlu0 %v157, 104
  %v246 = vpop.permute.xlu0 %245
  %247 = vrot.lane.b32.xlu0 %v244, 104
  %v248 = vpop.permute.xlu0 %247
  %249 = vrot.lane.b32.xlu0 %v153, 104
  %v250 = vpop.permute.xlu0 %249
  %v254 = vsel %vm167, %v171, %v168
  %255 = vrot.lane.b32.xlu0 %v172, 112
  %v256 = vpop.permute.xlu0 %255
  %257 = vrot.lane.b32.xlu0 %v254, 112
  %v258 = vpop.permute.xlu0 %257
  %259 = vrot.lane.b32.xlu0 %v168, 112
  %v260 = vpop.permute.xlu0 %259
  %v264 = vrot.slane %v17, 7
  %v265 = vrot.slane %v18, 7
  %v266 = vsel %vm182, %v264, %v265
  %267 = vrot.lane.b32.xlu0 %v264, 120
  %v268 = vpop.permute.xlu0 %267
  %269 = vrot.lane.b32.xlu0 %v266, 120
  %v270 = vpop.permute.xlu0 %269
  %271 = vrot.lane.b32.xlu0 %v265, 120
  %v272 = vpop.permute.xlu0 %271
  %vm276 = vcmask 64512
  %v277 = vsel %vm276, 0.0, %v100
  %v278 = vsel %vm276, %v86, %v102
  %v279 = vsel %vm276, %v87, %v104
  %vm280 = vcmask 130048
  %v281 = vsel %vm280, %v277, %v115
  %v282 = vsel %vm280, %v278, %v117
  %v283 = vsel %vm280, %v279, %v119
  %vm284 = vcmask 195584
  %v285 = vsel %vm284, %v281, %v130
  %v286 = vsel %vm284, %v282, %v132
  %v287 = vsel %vm284, %v283, %v134
  %vm288 = vcmask 261120
  %v289 = vsel %vm288, %v285, %v144
  %v290 = vsel %vm288, %v286, %v146
  %v291 = vsel %vm288, %v287, %v148
  %vm292 = vcmask 326656
  %v293 = vsel %vm292, %v289, %v159
  %v294 = vsel %vm292, %v290, %v161
  %v295 = vsel %vm292, %v291, %v163
  %vm296 = vcmask 392192
  %v297 = vsel %vm296, %v293, %v174
  %v298 = vsel %vm296, %v294, %v176
  %v299 = vsel %vm296, %v295, %v178
  %vm300 = vcmask 457728
  %v301 = vsel %vm300, %v297, %v187
  %v302 = vsel %vm300, %v298, %v189
  %v303 = vsel %vm300, %v299, %v191
  %vm304 = vcmask 523264
  %v305 = vsel %vm304, %v301, %v196
  %v306 = vsel %vm304, %v302, %v198
  %v307 = vsel %vm304, %v303, %v200
  %vm308 = vcmask 588800
  %v309 = vsel %vm308, %v305, %v206
  %v310 = vsel %vm308, %v306, %v208
  %v311 = vsel %vm308, %v307, %v210
  %vm312 = vcmask 654336
  %v313 = vsel %vm312, %v309, %v216
  %v314 = vsel %vm312, %v310, %v218
  %v315 = vsel %vm312, %v311, %v220
  %vm316 = vcmask 719872
  %v317 = vsel %vm316, %v313, %v226
  %v318 = vsel %vm316, %v314, %v228
  %v319 = vsel %vm316, %v315, %v230
  %vm320 = vcmask 785408
  %v321 = vsel %vm320, %v317, %v236
  %v322 = vsel %vm320, %v318, %v238
  %v323 = vsel %vm320, %v319, %v240
  %vm324 = vcmask 850944
  %v325 = vsel %vm324, %v321, %v246
  %v326 = vsel %vm324, %v322, %v248
  %v327 = vsel %vm324, %v323, %v250
  %vm328 = vcmask 916480
  %v329 = vsel %vm328, %v325, %v256
  %v330 = vsel %vm328, %v326, %v258
  %v331 = vsel %vm328, %v327, %v260
  %vm332 = vcmask 982016
  %v333 = vsel %vm332, %v329, %v268
  %v334 = vsel %vm332, %v330, %v270
  %v335 = vsel %vm332, %v331, %v272
  %v338 = vrot.slane %v88, 1
  %v339 = vsel %vm93, %v94, %v338
  %v340 = vrot.slane %v89, 1
  %v341 = vsel %vm93, %v338, %v340
  %342 = vrot.lane.b32.xlu0 %v339, 8
  %v343 = vpop.permute.xlu0 %342
  %344 = vrot.lane.b32.xlu0 %v341, 8
  %v345 = vpop.permute.xlu0 %344
  %346 = vrot.lane.b32.xlu0 %v340, 8
  %v347 = vpop.permute.xlu0 %346
  %v351 = vrot.slane %v88, 2
  %v352 = vsel %vm108, %v109, %v351
  %v353 = vrot.slane %v89, 2
  %v354 = vsel %vm108, %v351, %v353
  %355 = vrot.lane.b32.xlu0 %v352, 16
  %v356 = vpop.permute.xlu0 %355
  %357 = vrot.lane.b32.xlu0 %v354, 16
  %v358 = vpop.permute.xlu0 %357
  %359 = vrot.lane.b32.xlu0 %v353, 16
  %v360 = vpop.permute.xlu0 %359
  %v364 = vrot.slane %v88, 3
  %v365 = vsel %vm123, %v124, %v364
  %v366 = vrot.slane %v89, 3
  %v367 = vsel %vm123, %v364, %v366
  %368 = vrot.lane.b32.xlu0 %v365, 24
  %v369 = vpop.permute.xlu0 %368
  %370 = vrot.lane.b32.xlu0 %v367, 24
  %v371 = vpop.permute.xlu0 %370
  %372 = vrot.lane.b32.xlu0 %v366, 24
  %v373 = vpop.permute.xlu0 %372
  %v377 = vrot.slane %v88, 4
  %v378 = vsel %vm44, %v138, %v377
  %v379 = vrot.slane %v89, 4
  %v380 = vsel %vm44, %v377, %v379
  %381 = vrot.lane.b32.xlu0 %v378, 32
  %v382 = vpop.permute.xlu0 %381
  %383 = vrot.lane.b32.xlu0 %v380, 32
  %v384 = vpop.permute.xlu0 %383
  %385 = vrot.lane.b32.xlu0 %v379, 32
  %v386 = vpop.permute.xlu0 %385
  %v390 = vrot.slane %v88, 5
  %v391 = vsel %vm152, %v153, %v390
  %v392 = vrot.slane %v89, 5
  %v393 = vsel %vm152, %v390, %v392
  %394 = vrot.lane.b32.xlu0 %v391, 40
  %v395 = vpop.permute.xlu0 %394
  %396 = vrot.lane.b32.xlu0 %v393, 40
  %v397 = vpop.permute.xlu0 %396
  %398 = vrot.lane.b32.xlu0 %v392, 40
  %v399 = vpop.permute.xlu0 %398
  %v403 = vrot.slane %v88, 6
  %v404 = vsel %vm167, %v168, %v403
  %v405 = vrot.slane %v89, 6
  %v406 = vsel %vm167, %v403, %v405
  %407 = vrot.lane.b32.xlu0 %v404, 48
  %v408 = vpop.permute.xlu0 %407
  %409 = vrot.lane.b32.xlu0 %v406, 48
  %v410 = vpop.permute.xlu0 %409
  %411 = vrot.lane.b32.xlu0 %v405, 48
  %v412 = vpop.permute.xlu0 %411
  %v416 = vrot.slane %v88, 7
  %v417 = vrot.slane %v89, 7
  %v418 = vsel %vm182, %v416, %v417
  %419 = vrot.lane.b32.xlu0 %v416, 56
  %v420 = vpop.permute.xlu0 %419
  %421 = vrot.lane.b32.xlu0 %v418, 56
  %v422 = vpop.permute.xlu0 %421
  %423 = vrot.lane.b32.xlu0 %v417, 56
  %v424 = vpop.permute.xlu0 %423
  %428 = vrot.lane.b32.xlu0 %v88, 64
  %v429 = vpop.permute.xlu0 %428
  %430 = vrot.lane.b32.xlu0 %v89, 64
  %v431 = vpop.permute.xlu0 %430
  %v434 = vsel %vm93, %v340, %v94
  %435 = vrot.lane.b32.xlu0 %v341, 72
  %v436 = vpop.permute.xlu0 %435
  %437 = vrot.lane.b32.xlu0 %v434, 72
  %v438 = vpop.permute.xlu0 %437
  %v441 = vsel %vm108, %v353, %v109
  %442 = vrot.lane.b32.xlu0 %v354, 80
  %v443 = vpop.permute.xlu0 %442
  %444 = vrot.lane.b32.xlu0 %v441, 80
  %v445 = vpop.permute.xlu0 %444
  %v448 = vsel %vm123, %v366, %v124
  %449 = vrot.lane.b32.xlu0 %v367, 88
  %v450 = vpop.permute.xlu0 %449
  %451 = vrot.lane.b32.xlu0 %v448, 88
  %v452 = vpop.permute.xlu0 %451
  %v455 = vsel %vm44, %v379, %v138
  %456 = vrot.lane.b32.xlu0 %v380, 96
  %v457 = vpop.permute.xlu0 %456
  %458 = vrot.lane.b32.xlu0 %v455, 96
  %v459 = vpop.permute.xlu0 %458
  %v462 = vsel %vm152, %v392, %v153
  %463 = vrot.lane.b32.xlu0 %v393, 104
  %v464 = vpop.permute.xlu0 %463
  %465 = vrot.lane.b32.xlu0 %v462, 104
  %v466 = vpop.permute.xlu0 %465
  %v469 = vsel %vm167, %v405, %v168
  %470 = vrot.lane.b32.xlu0 %v406, 112
  %v471 = vpop.permute.xlu0 %470
  %472 = vrot.lane.b32.xlu0 %v469, 112
  %v473 = vpop.permute.xlu0 %472
  %v476 = vrot.slane %v19, 7
  %v477 = vrot.slane %v20, 7
  %v478 = vsel %vm182, %v476, %v477
  %479 = vrot.lane.b32.xlu0 %v476, 120
  %v480 = vpop.permute.xlu0 %479
  %481 = vrot.lane.b32.xlu0 %v478, 120
  %v482 = vpop.permute.xlu0 %481
  %483 = vrot.lane.b32.xlu0 %v477, 120
  %v484 = vpop.permute.xlu0 %483
  %v488 = vsel %vm276, 0.0, %v343
  %v489 = vsel %vm276, %v88, %v345
  %v490 = vsel %vm276, %v89, %v347
  %v491 = vsel %vm280, %v488, %v356
  %v492 = vsel %vm280, %v489, %v358
  %v493 = vsel %vm280, %v490, %v360
  %v494 = vsel %vm284, %v491, %v369
  %v495 = vsel %vm284, %v492, %v371
  %v496 = vsel %vm284, %v493, %v373
  %v497 = vsel %vm288, %v494, %v382
  %v498 = vsel %vm288, %v495, %v384
  %v499 = vsel %vm288, %v496, %v386
  %v500 = vsel %vm292, %v497, %v395
  %v501 = vsel %vm292, %v498, %v397
  %v502 = vsel %vm292, %v499, %v399
  %v503 = vsel %vm296, %v500, %v408
  %v504 = vsel %vm296, %v501, %v410
  %v505 = vsel %vm296, %v502, %v412
  %v506 = vsel %vm300, %v503, %v420
  %v507 = vsel %vm300, %v504, %v422
  %v508 = vsel %vm300, %v505, %v424
  %v509 = vsel %vm304, %v506, %v429
  %v510 = vsel %vm304, %v507, %v431
  %v511 = vsel %vm304, %v508, %v200
  %v512 = vsel %vm308, %v509, %v436
  %v513 = vsel %vm308, %v510, %v438
  %v514 = vsel %vm308, %v511, %v210
  %v515 = vsel %vm312, %v512, %v443
  %v516 = vsel %vm312, %v513, %v445
  %v517 = vsel %vm312, %v514, %v220
  %v518 = vsel %vm316, %v515, %v450
  %v519 = vsel %vm316, %v516, %v452
  %v520 = vsel %vm316, %v517, %v230
  %v521 = vsel %vm320, %v518, %v457
  %v522 = vsel %vm320, %v519, %v459
  %v523 = vsel %vm320, %v520, %v240
  %v524 = vsel %vm324, %v521, %v464
  %v525 = vsel %vm324, %v522, %v466
  %v526 = vsel %vm324, %v523, %v250
  %v527 = vsel %vm328, %v524, %v471
  %v528 = vsel %vm328, %v525, %v473
  %v529 = vsel %vm328, %v526, %v260
  %v530 = vsel %vm332, %v527, %v480
  %v531 = vsel %vm332, %v528, %v482
  %v532 = vsel %vm332, %v529, %v484
  %v536 = vrot.slane %v333, 1
  %v537 = vrot.slane %v334, 1
  %v538 = vsel %vm93, %v536, %v537
  %v539 = vrot.slane %v268, 1
  %v540 = vrot.slane %v270, 1
  %v541 = vsel %vm93, %v539, %v540
  %v542 = vrot.slane %v335, 1
  %v543 = vsel %vm93, %v537, %v542
  %v544 = vrot.slane %v272, 1
  %v545 = vsel %vm93, %v540, %v544
  %v551 = vrot.slane %v530, 1
  %v552 = vrot.slane %v531, 1
  %v553 = vsel %vm93, %v551, %v552
  %v554 = vrot.slane %v480, 1
  %v555 = vrot.slane %v482, 1
  %v556 = vsel %vm93, %v554, %v555
  %v557 = vrot.slane %v532, 1
  %v558 = vsel %vm93, %v552, %v557
  %v559 = vrot.slane %v484, 1
  %v560 = vsel %vm93, %v555, %v559
  %v563 = vld [vmem:[%s2] sm:$0xff]
  %v564 = vld [vmem:[%s2 + $0x8] sm:$0xff]
  %v565 = vld [vmem:[%s2 + $0x10] sm:$0xff]
  %v566 = vld [vmem:[%s2 + $0x18] sm:$0xff]
  %v567 = vld [vmem:[%s2 + $0x20] sm:$0xff]
  %v568 = vld [vmem:[%s2 + $0x28] sm:$0xff]
  %v569 = vld [vmem:[%s2 + $0x30] sm:$0xff]
  %v570 = vld [vmem:[%s2 + $0x38] sm:$0xff]
  %v571 = vld [vmem:[%s2 + $0x40] sm:$0xff]
  %v572 = vld [vmem:[%s2 + $0x48] sm:$0xff]
  %v573 = vld [vmem:[%s2 + $0x50] sm:$0xff]
  %v574 = vld [vmem:[%s2 + $0x58] sm:$0xff]
  %v575 = vld [vmem:[%s2 + $0x60] sm:$0xff]
  %v576 = vld [vmem:[%s2 + $0x68] sm:$0xff]
  %v577 = vld [vmem:[%s2 + $0x70] sm:$0xff]
  %v578 = vld [vmem:[%s2 + $0x78] sm:$0xff]
  %v579 = vld [vmem:[%s2 + $0x80] sm:$0xff]
  %v580 = vld [vmem:[%s2 + $0x88] sm:$0xff]
  %v581 = vld [vmem:[%s2 + $0x90] sm:$0xff]
  %v582 = vld [vmem:[%s2 + $0x98] sm:$0xff]
  %v583 = vld [vmem:[%s2 + $0xa0] sm:$0xff]
  %v584 = vld [vmem:[%s2 + $0xa8] sm:$0xff]
  %v585 = vld [vmem:[%s2 + $0xb0] sm:$0xf]
  %v586 = vperm.slane %v21, 2
  %vm587 = vcmask 424960
  %v588 = vsel %vm587, %v541, 0
  %v590 = vsel %vm587, %v545, 0
  %v592 = vsel %vm587, %v556, 0
  %v594 = vsel %vm587, %v560, 0
  %v597 = vsel %vm44, %v585, 0
  %599 = vmatpush.msra.mxu0 %v578
  %600 = vmatpush.msra.mxu0 %v577
  %601 = vmatpush.msra.mxu0 %v576
  %602 = vmatpush.msra.mxu0 %v575
  %603 = vmatpush.msra.mxu0 %v574
  %604 = vmatpush.msra.mxu0 %v573
  %605 = vmatpush.msra.mxu0 %v572
  %606 = vmatpush.msra.mxu0 %v571
  %607 = vmatpush.msra.mxu0 %v570
  %608 = vmatpush.msra.mxu0 %v569
  %609 = vmatpush.msra.mxu0 %v568
  %610 = vmatpush.msra.mxu0 %v567
  %611 = vmatpush.msra.mxu0 %v566
  %612 = vmatpush.msra.mxu0 %v565
  %613 = vmatpush.msra.mxu0 %v564
  %614 = vmatpush.msra.mxu0 %v563
  %615 = vmatmul.f32.gmra.mxu0 %v538
  %v616 = vpop.f32.mrf.mxu0
  %v617 = vadd.f32 %v586, %v616
  %618 = vmatmul.f32.gmra.mxu0 %v543
  %v619 = vpop.f32.mrf.mxu0
  %v620 = vadd.f32 %v586, %v619
  %621 = vmatmul.f32.gmra.mxu0 %v553
  %v622 = vpop.f32.mrf.mxu0
  %v623 = vadd.f32 %v586, %v622
  %624 = vmatmul.f32.gmra.mxu0 %v558
  %v625 = vpop.f32.mrf.mxu0
  %v626 = vadd.f32 %v586, %v625
  %627 = vdwg.mxu0
  %628 = vmatpush.msra.mxu0 0.0
  %629 = vmatpush.msra.mxu0 0.0
  %630 = vmatpush.msra.mxu0 0.0
  %631 = vmatpush.msra.mxu0 0.0
  %632 = vmatpush.msra.mxu0 0.0
  %633 = vmatpush.msra.mxu0 0.0
  %634 = vmatpush.msra.mxu0 0.0
  %635 = vmatpush.msra.mxu0 0.0
  %636 = vmatpush.msra.mxu0 0.0
  %637 = vmatpush.msra.mxu0 %v597
  %638 = vmatpush.msra.mxu0 %v584
  %639 = vmatpush.msra.mxu0 %v583
  %640 = vmatpush.msra.mxu0 %v582
  %641 = vmatpush.msra.mxu0 %v581
  %642 = vmatpush.msra.mxu0 %v580
  %643 = vmatpush.msra.mxu0 %v579
  %644 = vmatmul.f32.gmra.mxu0 %v588
  %v645 = vpop.f32.mrf.mxu0
  %v646 = vadd.f32 %v617, %v645
  %647 = vmatmul.f32.gmra.mxu0 %v590
  %v648 = vpop.f32.mrf.mxu0
  %v649 = vadd.f32 %v620, %v648
  %650 = vmatmul.f32.gmra.mxu0 %v592
  %v651 = vpop.f32.mrf.mxu0
  %v652 = vadd.f32 %v623, %v651
  %653 = vmatmul.f32.gmra.mxu0 %v594
  %v654 = vpop.f32.mrf.mxu0
  %v655 = vadd.f32 %v626, %v654
  %656 = vdwg.mxu0
  %vm657 = vcmp.ge.f32.partialorder %v646, 0.0
  %vm658 = vcmp.ge.f32.partialorder %v649, 0.0
  %vm659 = vcmp.ge.f32.partialorder %v652, 0.0
  %vm660 = vcmp.ge.f32.partialorder %v655, 0.0
  %v661 = vperm.slane %v21, 3
  %v662 = vmul.f32 %v661, %v646
  %v663 = vmul.f32 %v661, %v649
  %v664 = vmul.f32 %v661, %v652
  %v665 = vmul.f32 %v661, %v655
  %v666 = vsel %vm657, %v646, %v662
  %v667 = vsel %vm658, %v649, %v663
  %v668 = vsel %vm659, %v652, %v664
  %v669 = vsel %vm660, %v655, %v665
  %v671 = vrot.slane %v666, 1
  %672 = vrot.lane.b32.xlu0 %v671, 8
  %v673 = vpop.permute.xlu0 %672
  %v675 = vrot.slane %v666, 2
  %676 = vrot.lane.b32.xlu0 %v675, 16
  %v677 = vpop.permute.xlu0 %676
  %v679 = vrot.slane %v666, 3
  %680 = vrot.lane.b32.xlu0 %v679, 24
  %v681 = vpop.permute.xlu0 %680
  %v683 = vrot.slane %v666, 4
  %684 = vrot.lane.b32.xlu0 %v683, 32
  %v685 = vpop.permute.xlu0 %684
  %v687 = vrot.slane %v666, 5
  %688 = vrot.lane.b32.xlu0 %v687, 40
  %v689 = vpop.permute.xlu0 %688
  %v691 = vrot.slane %v666, 6
  %692 = vrot.lane.b32.xlu0 %v691, 48
  %v693 = vpop.permute.xlu0 %692
  %v695 = vrot.slane %v666, 7
  %696 = vrot.lane.b32.xlu0 %v695, 56
  %v697 = vpop.permute.xlu0 %696
  %700 = vrot.lane.b32.xlu0 %v667, 64
  %v701 = vpop.permute.xlu0 %700
  %v703 = vrot.slane %v667, 1
  %704 = vrot.lane.b32.xlu0 %v703, 72
  %v705 = vpop.permute.xlu0 %704
  %v707 = vrot.slane %v667, 2
  %708 = vrot.lane.b32.xlu0 %v707, 80
  %v709 = vpop.permute.xlu0 %708
  %v711 = vrot.slane %v667, 3
  %712 = vrot.lane.b32.xlu0 %v711, 88
  %v713 = vpop.permute.xlu0 %712
  %v715 = vrot.slane %v667, 4
  %716 = vrot.lane.b32.xlu0 %v715, 96
  %v717 = vpop.permute.xlu0 %716
  %v719 = vrot.slane %v667, 5
  %720 = vrot.lane.b32.xlu0 %v719, 104
  %v721 = vpop.permute.xlu0 %720
  %v723 = vrot.slane %v667, 6
  %724 = vrot.lane.b32.xlu0 %v723, 112
  %v725 = vpop.permute.xlu0 %724
  %v727 = vrot.slane %v667, 7
  %728 = vrot.lane.b32.xlu0 %v727, 120
  %v729 = vpop.permute.xlu0 %728
  %v731 = vsel %vm276, %v666, %v673
  %v732 = vsel %vm280, %v731, %v677
  %v733 = vsel %vm284, %v732, %v681
  %v734 = vsel %vm288, %v733, %v685
  %v735 = vsel %vm292, %v734, %v689
  %v736 = vsel %vm296, %v735, %v693
  %v737 = vsel %vm300, %v736, %v697
  %v738 = vsel %vm304, %v737, %v701
  %v739 = vsel %vm308, %v738, %v705
  %v740 = vsel %vm312, %v739, %v709
  %v741 = vsel %vm316, %v740, %v713
  %v742 = vsel %vm320, %v741, %v717
  %v743 = vsel %vm324, %v742, %v721
  %v744 = vsel %vm328, %v743, %v725
  %v745 = vsel %vm332, %v744, %v729
  %v747 = vrot.slane %v668, 1
  %748 = vrot.lane.b32.xlu0 %v747, 8
  %v749 = vpop.permute.xlu0 %748
  %v751 = vrot.slane %v668, 2
  %752 = vrot.lane.b32.xlu0 %v751, 16
  %v753 = vpop.permute.xlu0 %752
  %v755 = vrot.slane %v668, 3
  %756 = vrot.lane.b32.xlu0 %v755, 24
  %v757 = vpop.permute.xlu0 %756
  %v759 = vrot.slane %v668, 4
  %760 = vrot.lane.b32.xlu0 %v759, 32
  %v761 = vpop.permute.xlu0 %760
  %v763 = vrot.slane %v668, 5
  %764 = vrot.lane.b32.xlu0 %v763, 40
  %v765 = vpop.permute.xlu0 %764
  %v767 = vrot.slane %v668, 6
  %768 = vrot.lane.b32.xlu0 %v767, 48
  %v769 = vpop.permute.xlu0 %768
  %v771 = vrot.slane %v668, 7
  %772 = vrot.lane.b32.xlu0 %v771, 56
  %v773 = vpop.permute.xlu0 %772
  %776 = vrot.lane.b32.xlu0 %v669, 64
  %v777 = vpop.permute.xlu0 %776
  %v779 = vrot.slane %v669, 1
  %780 = vrot.lane.b32.xlu0 %v779, 72
  %v781 = vpop.permute.xlu0 %780
  %v783 = vrot.slane %v669, 2
  %784 = vrot.lane.b32.xlu0 %v783, 80
  %v785 = vpop.permute.xlu0 %784
  %v787 = vrot.slane %v669, 3
  %788 = vrot.lane.b32.xlu0 %v787, 88
  %v789 = vpop.permute.xlu0 %788
  %v791 = vrot.slane %v669, 4
  %792 = vrot.lane.b32.xlu0 %v791, 96
  %v793 = vpop.permute.xlu0 %792
  %v795 = vrot.slane %v669, 5
  %796 = vrot.lane.b32.xlu0 %v795, 104
  %v797 = vpop.permute.xlu0 %796
  %v799 = vrot.slane %v669, 6
  %800 = vrot.lane.b32.xlu0 %v799, 112
  %v801 = vpop.permute.xlu0 %800
  %v803 = vrot.slane %v669, 7
  %804 = vrot.lane.b32.xlu0 %v803, 120
  %v805 = vpop.permute.xlu0 %804
  %v807 = vsel %vm276, %v668, %v749
  %v808 = vsel %vm280, %v807, %v753
  %v809 = vsel %vm284, %v808, %v757
  %v810 = vsel %vm288, %v809, %v761
  %v811 = vsel %vm292, %v810, %v765
  %v812 = vsel %vm296, %v811, %v769
  %v813 = vsel %vm300, %v812, %v773
  %v814 = vsel %vm304, %v813, %v777
  %v815 = vsel %vm308, %v814, %v781
  %v816 = vsel %vm312, %v815, %v785
  %v817 = vsel %vm316, %v816, %v789
  %v818 = vsel %vm320, %v817, %v793
  %v819 = vsel %vm324, %v818, %v797
  %v820 = vsel %vm328, %v819, %v801
  %v821 = vsel %vm332, %v820, %v805
  %v823 = vrot.slane %v821, 7
  %v825 = vsel %vm182, %v745, %v823
  %826 = vst [vmem:[%s4] sm:$0x3] %v825
  // Predicated region
  $region18: #{resnet_block_unmasked.1} parent=0 // pred_check
    _
  $region19: #{resnet_block_unmasked.1} parent=0 // pred_check_branch
    %828 = sbr.rel (0) target = $region21
  $region20: #{resnet_block_unmasked.1} parent=0 // pred_region
    _
  $region21: #{resnet_block_unmasked.1} parent=0 // pred_fallthru
    _
  // Predicated region
  $region22: #{resnet_block_unmasked.1} parent=0 // pred_check
    _
  $region23: #{resnet_block_unmasked.1} parent=0 // pred_check_branch
    %830 = sbr.rel (0) target = $region25
  $region24: #{resnet_block_unmasked.1} parent=0 // pred_region
    _
  $region25: #{resnet_block_unmasked.1} parent=0 // pred_fallthru
    _

</llo_original>
